<compile_context>
chip_gen: v5e
topology: v5e:2x2
jax: 0.10.0
libtpu: 0.0.40
codegen_flags: <defaults>
</compile_context>

<pallas_src>
import jax
import jax.numpy as jnp
from jax.experimental import pallas as pl
from jax.experimental.pallas import tpu as pltpu


def _round_up(x, m):
    return ((x + m - 1) // m) * m


# ----------------------------------------------------------------------------
# Kernel body
# ----------------------------------------------------------------------------
def mnet_kernel(x_ref, w1_ref, b1_ref, w2_ref, b2_ref, o_ref):
    # Layer 1: MXU matmul with f32 accumulation. The x tile is cast to the
    # stored weight dtype (bf16 by default) so the MXU gets a native pair.
    x = x_ref[...].astype(w1_ref.dtype)
    h = jnp.dot(x, w1_ref[...], preferred_element_type=jnp.float32)
    # Bias + ReLU in f32 on the VPU (v5e has no bf16 VPU).
    h = jnp.maximum(h + b1_ref[...], 0.0)
    # Layer 2: cast the hidden activation back to the MXU dtype, f32 accum.
    y = jnp.dot(h.astype(w2_ref.dtype), w2_ref[...],
                preferred_element_type=jnp.float32)
    o_ref[...] = (y + b2_ref[...]).astype(o_ref.dtype)


# ----------------------------------------------------------------------------
# One-time parameter preparation (hoisted out of the forward hot path)
# ----------------------------------------------------------------------------
def prepare_params(w1, b1, w2, b2, *, mxu_dtype=jnp.bfloat16):
    """Pad the hidden dim to a lane-dense multiple of 128 and pre-cast the
    weights for the MXU. Call ONCE at init and reuse the result: this keeps
    every forward call free of per-call HBM padding/casting passes.

    w1: (In, H)  (already transposed vs. PyTorch's (H, In)),  b1: (H,)
    w2: (H, Out),                                             b2: (Out,)
    Zero padding is exact: padded hidden units have zero weights and zero
    bias, so ReLU(0) = 0 contributes nothing through the zero rows of w2.
    """
    In, H = w1.shape
    Out = w2.shape[1]
    H_p = _round_up(H, 128)
    wd = jnp.dtype(mxu_dtype) if mxu_dtype is not None else w1.dtype
    w1p = jnp.zeros((In, H_p), wd).at[:, :H].set(w1.astype(wd))
    b1p = jnp.zeros((1, H_p), jnp.float32).at[:, :H].set(
        b1.reshape(1, H).astype(jnp.float32))
    w2p = jnp.zeros((H_p, Out), wd).at[:H, :].set(w2.astype(wd))
    b2p = b2.reshape(1, Out).astype(jnp.float32)
    return w1p, b1p, w2p, b2p


def _resident_spec(block_shape):
    """BlockSpec for a grid-invariant (VMEM-resident) operand.  Buffered(1)
    avoids allocating a pointless second pipeline buffer for it."""
    index_map = lambda i: (0, 0)
    if hasattr(pl, "Buffered"):
        try:
            return pl.BlockSpec(block_shape, index_map,
                                pipeline_mode=pl.Buffered(1))
        except TypeError:
            pass
    return pl.BlockSpec(block_shape, index_map)


# ----------------------------------------------------------------------------
# Forward
# ----------------------------------------------------------------------------
def mnet_forward(x, w1p, b1p, w2p, b2p, *, batch_tile=None, interpret=False):
    """Fused Linear -> ReLU -> Linear using params from prepare_params().

    x   : (B, In)        (output keeps x.dtype)
    w1p : (In, H_p)      b1p: (1, H_p) f32
    w2p : (H_p, Out)     b2p: (1, Out) f32
    """
    B, In = x.shape
    assert w1p.shape[0] == In
    H_p = w1p.shape[1]
    Out = w2p.shape[1]
    out_dtype = x.dtype

    xb = jnp.dtype(x.dtype).itemsize
    ob = jnp.dtype(out_dtype).itemsize
    wb = jnp.dtype(w1p.dtype).itemsize

    # ---- generation-aware batch tile ----------------------------------------
    try:
        vmem_cap = int(pltpu.get_tpu_info().vmem_capacity_bytes)
    except Exception:  # interpret mode / non-TPU backend / older jax
        vmem_cap = 64 * 1024 * 1024  # conservative (v7x per-TC size)
    budget = int(vmem_cap * 0.7)

    # Resident weights/biases (x2 as safety in case Buffered(1) is unavailable).
    weight_bytes = 2 * ((w1p.size + w2p.size) * wb + (b1p.size + b2p.size) * 4)
    # Per-batch-row VMEM: double-buffered x/out tiles + casts + f32 temps.
    per_row = (2 * In * xb + 2 * Out * ob          # pipelined x / out blocks
               + In * wb + H_p * (4 + wb)          # cast x, f32 h, cast h
               + Out * 4)                          # f32 y before store
    per_row = int(per_row * 1.5)                   # compiler temp headroom

    B8 = _round_up(B, 8)
    tb = batch_tile if batch_tile is not None else 512
    tb_vmem = max(8, (budget - weight_bytes) // max(per_row, 1))
    tb = min(tb, tb_vmem, B8)
    if B8 > 8:
        # Keep at least 2 grid steps: feeds both TensorCores on v7x and gives
        # the x/out DMAs something to pipeline against on single-TC chips.
        tb = min(tb, _round_up(pl.cdiv(B8, 2), 8))
    tb = max(8, (tb // 8) * 8)

    grid = (pl.cdiv(B, tb),)

    vmem_limit = int(min(vmem_cap,
                         max(32 * 1024 * 1024,
                             int(1.25 * (weight_bytes + per_row * tb))
                             + (2 << 20))))

    cost = pl.CostEstimate(
        flops=2 * B * (In * H_p + H_p * Out),
        transcendentals=0,
        bytes_accessed=(x.size * xb
                        + (w1p.size + w2p.size) * wb
                        + (b1p.size + b2p.size) * 4
                        + B * Out * ob),
    )

    # TODO(synk): for layers where the resident (In,H_p)/(H_p,Out) weights no
    # longer fit VMEM (esp. v7x's 64 MiB), add a "parallel" Out-tile grid axis
    # and, for very large In, an innermost "arbitrary" K axis with a VMEM f32
    # accumulator + pl.when init/finalize.
    return pl.pallas_call(
        mnet_kernel,
        out_shape=jax.ShapeDtypeStruct((B, Out), out_dtype),
        grid=grid,
        in_specs=[
            pl.BlockSpec((tb, In), lambda i: (i, 0)),   # streamed batch tile
            _resident_spec((In, H_p)),                  # VMEM-resident w1
            _resident_spec((1, H_p)),                   # VMEM-resident b1
            _resident_spec((H_p, Out)),                 # VMEM-resident w2
            _resident_spec((1, Out)),                   # VMEM-resident b2
        ],
        out_specs=pl.BlockSpec((tb, Out), lambda i: (i, 0)),
        compiler_params=pltpu.CompilerParams(
            dimension_semantics=("parallel",),          # batch across TCs (v7x)
            vmem_limit_bytes=vmem_limit,
        ),
        cost_estimate=cost,
        interpret=interpret,
    )(x, w1p, b1p, w2p, b2p)


# ----------------------------------------------------------------------------
# Parameter init mirroring nn.Linear's U(-1/sqrt(fan_in), +1/sqrt(fan_in)).
# Weights returned already transposed to (in_features, out_features).
# ----------------------------------------------------------------------------
def init_params(key, input_size, hidden_size, output_size, dtype=jnp.float32):
    k1, k2, k3, k4 = jax.random.split(key, 4)
    bound1 = 1.0 / jnp.sqrt(input_size)
    bound2 = 1.0 / jnp.sqrt(hidden_size)
    w1 = jax.random.uniform(k1, (input_size, hidden_size), dtype,
                            minval=-bound1, maxval=bound1)
    b1 = jax.random.uniform(k2, (hidden_size,), dtype,
                            minval=-bound1, maxval=bound1)
    w2 = jax.random.uniform(k3, (hidden_size, output_size), dtype,
                            minval=-bound2, maxval=bound2)
    b2 = jax.random.uniform(k4, (output_size,), dtype,
                            minval=-bound2, maxval=bound2)
    return w1, b1, w2, b2


if __name__ == "__main__":
    batch = 8
    input_size = 16
    hidden_size = 32
    output_size = 8

    key = jax.random.PRNGKey(0)
    kx, kp = jax.random.split(key)
    x = jax.random.normal(kx, (batch, input_size), jnp.float32)
    w1, b1, w2, b2 = init_params(kp, input_size, hidden_size, output_size)

    # Pure-JAX f32 reference of the same forward pass.
    ref = jnp.maximum(x @ w1 + b1[None, :], 0.0) @ w2 + b2[None, :]

    # 1) Exact path: f32 MXU operands.
    params_f32 = prepare_params(w1, b1, w2, b2, mxu_dtype=None)
    out_f32 = mnet_forward(x, *params_f32)
    jax.block_until_ready(out_f32)
    assert out_f32.shape == (batch, output_size)
    assert jnp.allclose(out_f32, ref, atol=1e-4, rtol=1e-4)

    # 2) Fast path: bf16 MXU operands, f32 accumulation (default).
    params_bf16 = prepare_params(w1, b1, w2, b2)
    out_bf16 = mnet_forward(x, *params_bf16)
    jax.block_until_ready(out_bf16)
    assert out_bf16.shape == (batch, output_size)
    assert jnp.allclose(out_bf16, ref, atol=5e-2, rtol=5e-2)

    # 3) Multi-step grid + non-multiple-of-8 batch (edge-block masking path).
    x_big = jnp.concatenate([x, x, x, x, x], axis=0)[:33]        # (33, 16)
    ref_big = jnp.maximum(x_big @ w1 + b1[None, :], 0.0) @ w2 + b2[None, :]
    out_big = mnet_forward(x_big, *params_f32, batch_tile=16)
    jax.block_until_ready(out_big)
    assert out_big.shape == (33, output_size)
    assert jnp.allclose(out_big, ref_big, atol=1e-4, rtol=1e-4)

    print("KERNEL_OK")
</pallas_src>

<mosaic_0001>
module attributes {stable_mosaic.version = 11 : i64} {
  func.func @mnet_kernel(%arg0: i32, %arg1: memref<8x16xf32, #tpu.memory_space<vmem>>, %arg2: memref<16x128xf32, #tpu.memory_space<vmem>>, %arg3: memref<1x128xf32, #tpu.memory_space<vmem>>, %arg4: memref<128x8xf32, #tpu.memory_space<vmem>>, %arg5: memref<1x8xf32, #tpu.memory_space<vmem>>, %arg6: memref<8x8xf32, #tpu.memory_space<vmem>>) attributes {dimension_semantics = [#tpu.dimension_semantics<parallel>], iteration_bounds = array<i64: 1>, scalar_prefetch = 0 : i64, scratch_operands = 0 : i64, tpu.core_type = #tpu.core_type<tc>, window_params = [{transform_indices = @transform_0, window_bounds = array<i64: 8, 16>}, {pipeline_mode = #tpu.pipeline_mode<synchronous>, transform_indices = @transform_1, window_bounds = array<i64: 16, 128>}, {pipeline_mode = #tpu.pipeline_mode<synchronous>, transform_indices = @transform_2, window_bounds = array<i64: 1, 128>}, {pipeline_mode = #tpu.pipeline_mode<synchronous>, transform_indices = @transform_3, window_bounds = array<i64: 128, 8>}, {pipeline_mode = #tpu.pipeline_mode<synchronous>, transform_indices = @transform_4, window_bounds = array<i64: 1, 8>}, {transform_indices = @transform_5, window_bounds = array<i64: 8, 8>}]} {
    %c0 = arith.constant 0 : index
    %c0_0 = arith.constant 0 : index
    %0 = vector.load %arg1[%c0, %c0_0] : memref<8x16xf32, #tpu.memory_space<vmem>>, vector<8x16xf32>
    %c0_1 = arith.constant 0 : index
    %c0_2 = arith.constant 0 : index
    %1 = vector.load %arg2[%c0_1, %c0_2] : memref<16x128xf32, #tpu.memory_space<vmem>>, vector<16x128xf32>
    %cst = arith.constant dense<0.000000e+00> : vector<8x128xf32>
    %2 = tpu.matmul %0, %1, %cst {dimension_numbers = #tpu.dot_dimension_numbers<[1], [0], [0], [1], [0, 0, 1, 1], [], []>} : vector<8x16xf32>, vector<16x128xf32>, vector<8x128xf32> -> vector<8x128xf32>
    %c0_3 = arith.constant 0 : index
    %c0_4 = arith.constant 0 : index
    %3 = vector.load %arg3[%c0_3, %c0_4] : memref<1x128xf32, #tpu.memory_space<vmem>>, vector<1x128xf32>
    %4 = vector.broadcast %3 : vector<1x128xf32> to vector<8x128xf32>
    %5 = arith.addf %2, %4 : vector<8x128xf32>
    %cst_5 = arith.constant 0.000000e+00 : f32
    %6 = vector.broadcast %cst_5 : f32 to vector<8x128xf32>
    %7 = arith.maximumf %5, %6 : vector<8x128xf32>
    %c0_6 = arith.constant 0 : index
    %c0_7 = arith.constant 0 : index
    %8 = vector.load %arg4[%c0_6, %c0_7] : memref<128x8xf32, #tpu.memory_space<vmem>>, vector<128x8xf32>
    %cst_8 = arith.constant dense<0.000000e+00> : vector<8x8xf32>
    %9 = tpu.matmul %7, %8, %cst_8 {dimension_numbers = #tpu.dot_dimension_numbers<[1], [0], [0], [1], [0, 0, 1, 1], [], []>} : vector<8x128xf32>, vector<128x8xf32>, vector<8x8xf32> -> vector<8x8xf32>
    %c0_9 = arith.constant 0 : index
    %c0_10 = arith.constant 0 : index
    %10 = vector.load %arg5[%c0_9, %c0_10] : memref<1x8xf32, #tpu.memory_space<vmem>>, vector<1x8xf32>
    %11 = vector.broadcast %10 : vector<1x8xf32> to vector<8x8xf32>
    %12 = arith.addf %9, %11 : vector<8x8xf32>
    %c0_11 = arith.constant 0 : index
    %c0_12 = arith.constant 0 : index
    %13 = vector.load %arg6[%c0_11, %c0_12] : memref<8x8xf32, #tpu.memory_space<vmem>>, vector<8x8xf32>
    tpu.vector_store %arg6[%c0_11, %c0_12], %12 {strides = array<i32>} : memref<8x8xf32, #tpu.memory_space<vmem>>, vector<8x8xf32>,
    return
  }
  func.func @transform_0(%arg0: i32) -> (i32, i32) {
    %c0_i32 = arith.constant 0 : i32
    %c0_i32_0 = arith.constant 0 : i32
    return %arg0, %c0_i32 : i32, i32
  }
  func.func @transform_1(%arg0: i32) -> (i32, i32) {
    %c0_i32 = arith.constant 0 : i32
    %c0_i32_0 = arith.constant 0 : i32
    %c0_i32_1 = arith.constant 0 : i32
    return %c0_i32, %c0_i32_0 : i32, i32
  }
  func.func @transform_2(%arg0: i32) -> (i32, i32) {
    %c0_i32 = arith.constant 0 : i32
    %c0_i32_0 = arith.constant 0 : i32
    %c0_i32_1 = arith.constant 0 : i32
    return %c0_i32, %c0_i32_0 : i32, i32
  }
  func.func @transform_3(%arg0: i32) -> (i32, i32) {
    %c0_i32 = arith.constant 0 : i32
    %c0_i32_0 = arith.constant 0 : i32
    %c0_i32_1 = arith.constant 0 : i32
    return %c0_i32, %c0_i32_0 : i32, i32
  }
  func.func @transform_4(%arg0: i32) -> (i32, i32) {
    %c0_i32 = arith.constant 0 : i32
    %c0_i32_0 = arith.constant 0 : i32
    %c0_i32_1 = arith.constant 0 : i32
    return %c0_i32, %c0_i32_0 : i32, i32
  }
  func.func @transform_5(%arg0: i32) -> (i32, i32) {
    %c0_i32 = arith.constant 0 : i32
    %c0_i32_0 = arith.constant 0 : i32
    return %arg0, %c0_i32 : i32, i32
  }
}

</mosaic_0001>

<llo_original>
// kernel: tpu_custom_call.1
$region0: #{tpu_custom_call.1}
  #allocation0 [shape = 'u32[]', space=smem, size = 0x4, offset = 0x4, fixed_abs, tag = 'smem constant byte address 0x4 - core index']
  #allocation1 [shape = 'u32[72,128]{1,0:T(1,128)}', space=vmem, size = 0x9000, scoped, tag = 'internal scratch']
  %s0 = inlined_call_operand.vmem [shape: f32[8,16], index: 0, kind: input, shape index: {}]
  %s1 = inlined_call_operand.vmem [shape: f32[16,128], index: 1, kind: input, shape index: {}]
  %s2 = inlined_call_operand.vmem [shape: f32[1,128], index: 2, kind: input, shape index: {}]
  %s3 = inlined_call_operand.vmem [shape: f32[128,8], index: 3, kind: input, shape index: {}]
  %s4 = inlined_call_operand.vmem [shape: f32[1,8], index: 4, kind: input, shape index: {}]
  %s5 = inlined_call_operand.hbm [shape: f32[8,8], index: 5, kind: output, shape index: {}]
  %s6 = sld [smem:[#allocation0]]
  $region30: #{tpu_custom_call.1} parent=0
    _
  %s8 = ssub.s32 1, %s6
  %s9 = scalar_select 0, %s8, %s6
  $region1: #{tpu_custom_call.1} parent=0
    #allocation2 [shape = 'u8[4096]{0}', space=vmem, size = 0x1000, scoped, tag = 'output window, operand 0, single buffered']
    #allocation3 [shape = 's32[1]{0}', space=sflag, size = 0x4, scoped, tag = 'scoped memory for tpu_custom_call.1']
    %10 = vsyncpa [#allocation3], 0
    // Predicated region
    $region2: #{tpu_custom_call.1} parent=1 // pred_check
      _
    $region3: #{tpu_custom_call.1} parent=1 // pred_check_branch
      %12 = sbr.rel (0) target = $region5
    $region4: #{tpu_custom_call.1} parent=1 // pred_region
      _
    $region5: #{tpu_custom_call.1} parent=1 // pred_fallthru
      _
    // Predicated region
    $region6: #{tpu_custom_call.1} parent=1 // pred_check
      _
    $region7: #{tpu_custom_call.1} parent=1 // pred_check_branch
      %14 = sbr.rel (0) target = $region9
    $region8: #{tpu_custom_call.1} parent=1 // pred_region
      _
    $region9: #{tpu_custom_call.1} parent=1 // pred_fallthru
      _
    // Predicated region
    $region10: #{tpu_custom_call.1} parent=1 // pred_check
      _
    $region11: #{tpu_custom_call.1} parent=1 // pred_check_branch
      %16 = sbr.rel (0) target = $region13
    $region12: #{tpu_custom_call.1} parent=1 // pred_region
      _
    $region13: #{tpu_custom_call.1} parent=1 // pred_fallthru
      _
    // Predicated region
    $region14: #{tpu_custom_call.1} parent=1 // pred_check
      _
    $region15: #{tpu_custom_call.1} parent=1 // pred_check_branch
      %18 = sbr.rel (0) target = $region17
    $region16: #{tpu_custom_call.1} parent=1 // pred_region
      _
    $region17: #{tpu_custom_call.1} parent=1 // pred_fallthru
      _
    // Predicated region
    $region18: #{tpu_custom_call.1} parent=1 // pred_check
      _
    $region19: #{tpu_custom_call.1} parent=1 // pred_check_branch
      %20 = sbr.rel (0) target = $region21
    $region20: #{tpu_custom_call.1} parent=1 // pred_region
      _
    $region21: #{tpu_custom_call.1} parent=1 // pred_fallthru
      _
    %v21 = vld [vmem:[%s0] sm:$0xff]
    %v22 = vld [vmem:[%s1] sm:$0xff]
    %v23 = vld [vmem:[%s1 + $0x8] sm:$0xff]
    %v24 = vld [vmem:[%s2] sm:$0x1]
    %v26 = vperm.slane %v24, 0
    %vm28 = vcmask 130048
    %v30 = vsel %vm28, %v21, 0
    %32 = vmatpush.msra.mxu0 0.0
    %33 = vmatpush.msra.mxu0 0.0
    %34 = vmatpush.msra.mxu0 0.0
    %35 = vmatpush.msra.mxu0 0.0
    %36 = vmatpush.msra.mxu0 0.0
    %37 = vmatpush.msra.mxu0 0.0
    %38 = vmatpush.msra.mxu0 0.0
    %39 = vmatpush.msra.mxu0 0.0
    %40 = vmatpush.msra.mxu0 0.0
    %41 = vmatpush.msra.mxu0 0.0
    %42 = vmatpush.msra.mxu0 0.0
    %43 = vmatpush.msra.mxu0 0.0
    %44 = vmatpush.msra.mxu0 0.0
    %45 = vmatpush.msra.mxu0 0.0
    %46 = vmatpush.msra.mxu0 %v23
    %47 = vmatpush.msra.mxu0 %v22
    %48 = vmatmul.f32.gmra.mxu0 %v30
    %v49 = vpop.f32.mrf.mxu0
    %v50 = vadd.f32 %v26, %v49
    %51 = vdwg.mxu0
    %v52 = vmax.f32 %v50, 0.0
    %v53 = vld [vmem:[%s3] sm:$0xff]
    %v54 = vld [vmem:[%s3 + $0x8] sm:$0xff]
    %v55 = vld [vmem:[%s3 + $0x10] sm:$0xff]
    %v56 = vld [vmem:[%s3 + $0x18] sm:$0xff]
    %v57 = vld [vmem:[%s3 + $0x20] sm:$0xff]
    %v58 = vld [vmem:[%s3 + $0x28] sm:$0xff]
    %v59 = vld [vmem:[%s3 + $0x30] sm:$0xff]
    %v60 = vld [vmem:[%s3 + $0x38] sm:$0xff]
    %v61 = vld [vmem:[%s3 + $0x40] sm:$0xff]
    %v62 = vld [vmem:[%s3 + $0x48] sm:$0xff]
    %v63 = vld [vmem:[%s3 + $0x50] sm:$0xff]
    %v64 = vld [vmem:[%s3 + $0x58] sm:$0xff]
    %v65 = vld [vmem:[%s3 + $0x60] sm:$0xff]
    %v66 = vld [vmem:[%s3 + $0x68] sm:$0xff]
    %v67 = vld [vmem:[%s3 + $0x70] sm:$0xff]
    %v68 = vld [vmem:[%s3 + $0x78] sm:$0xff]
    %v69 = vld [vmem:[%s4] sm:$0x1]
    %v71 = vperm.slane %v69, 0
    %73 = vmatpush.msra.mxu0 %v68
    %74 = vmatpush.msra.mxu0 %v67
    %75 = vmatpush.msra.mxu0 %v66
    %76 = vmatpush.msra.mxu0 %v65
    %77 = vmatpush.msra.mxu0 %v64
    %78 = vmatpush.msra.mxu0 %v63
    %79 = vmatpush.msra.mxu0 %v62
    %80 = vmatpush.msra.mxu0 %v61
    %81 = vmatpush.msra.mxu0 %v60
    %82 = vmatpush.msra.mxu0 %v59
    %83 = vmatpush.msra.mxu0 %v58
    %84 = vmatpush.msra.mxu0 %v57
    %85 = vmatpush.msra.mxu0 %v56
    %86 = vmatpush.msra.mxu0 %v55
    %87 = vmatpush.msra.mxu0 %v54
    %88 = vmatpush.msra.mxu0 %v53
    %89 = vmatmul.f32.gmra.mxu0 %v52
    %v90 = vpop.f32.mrf.mxu0
    %v91 = vadd.f32 %v71, %v90
    %92 = vdwg.mxu0
    %vm93 = vcmask 64512
    %94 = vst.msk [vmem:[#allocation2] sm:$0xff] %vm93, %v91
    // Predicated region
    $region22: #{tpu_custom_call.1} parent=1 // pred_check
      _
    $region23: #{tpu_custom_call.1} parent=1 // pred_check_branch
      %96 = sbr.rel (0) target = $region25
    $region24: #{tpu_custom_call.1} parent=1 // pred_region
      %98 = vsyncadd [#allocation3], 0
      %s100 = sshll.u32 [#allocation2], 4
      %s101 = int_to_ptr.vmem [resolvable:$true] %s100
      %s102 = sshll.u32 %s5, 4
      %s103 = int_to_ptr.hbm [resolvable:$true] %s102
      %105 = dma.vmem_to_hbm [thread:$0]  %s101, 128, %s103, [#allocation3]
    $region25: #{tpu_custom_call.1} parent=1 // pred_fallthru
      _
    // Predicated region
    $region26: #{tpu_custom_call.1} parent=1 // pred_check
      _
    $region27: #{tpu_custom_call.1} parent=1 // pred_check_branch
      %107 = sbr.rel (0) target = $region29
    $region28: #{tpu_custom_call.1} parent=1 // pred_region
      %109 = dma.done [#allocation3], 128
    $region29: #{tpu_custom_call.1} parent=1 // pred_fallthru
      _
    %110 = vsyncpa [#allocation3], 1

</llo_original>
